<compile_context>
chip_gen: v5e
topology: v5e:2x2
jax: 0.10.0
libtpu: 0.0.40
codegen_flags: <defaults>
</compile_context>

<pallas_src>
import jax
import jax.numpy as jnp
from jax.experimental import pallas as pl
from jax.experimental.pallas import tpu as pltpu

_LANES = 128
_TARGET_TILE_BYTES = 4 << 20   # ~4 MiB per (rows, 128) tile, dtype-aware rows
_VMEM_LIMIT_BYTES = 32 << 20   # fits v5e/v6e (128 MiB phys) and v7x (64 MiB)


def _dropsample_kernel(x_ref, s_ref, o_ref):
    # x_ref / o_ref: (tile_rows, 128) lane-dense tile.
    # s_ref: (tile_rows, 1) per-row scale already cast to x's dtype.
    # Single dtype-native VPU multiply; the lane broadcast of the (rows, 1)
    # scale is negligible next to HBM traffic (kernel is bandwidth-bound).
    o_ref[...] = x_ref[...] * s_ref[...]


def dropsample(x, prob, key, training=True):
    """JAX/Pallas equivalent of Dropsample.forward (NCHW input).

    NOTE: `prob` must be a static Python float (matches the nn.Module attr);
    a traced value here would hit the Python `if` below.
    """
    if prob == 0.0 or not training:
        return x

    B, C, H, W = x.shape
    L = C * H * W
    itemsize = jnp.dtype(x.dtype).itemsize

    # Per-sample scale: keep / (1 - prob).  prob == 1.0 is safe (where -> 0).
    u = jax.random.uniform(key, (B,), dtype=jnp.float32)
    inv_keep = 1.0 / (1.0 - jnp.float32(prob))
    scales = jnp.where(u > prob, inv_keep, jnp.float32(0.0))

    # Lane-dense layout: pad each sample's flattened slab only to a multiple of
    # 128 lanes (sublane compliance comes from tile_rows, not the array's row
    # count), so L % 128 == 0 -> zero-copy reshape, no extra HBM pass.
    Lp = ((L + _LANES - 1) // _LANES) * _LANES
    x_flat = x.reshape(B, L)
    if Lp != L:
        x_flat = jnp.pad(x_flat, ((0, 0), (0, Lp - L)))
    S = Lp // _LANES
    total_rows = B * S
    x_rows = x_flat.reshape(total_rows, _LANES)

    # Per-row scale (row r belongs to sample r // S), cast to x's dtype in the
    # wrapper so the kernel body needs no upcast.  ~0.8% extra HBM traffic.
    s_rows = jnp.repeat(scales, S).astype(x.dtype).reshape(total_rows, 1)

    # Dtype-aware tile sizing: ~4 MiB tiles (8192 rows f32 / 16384 rows bf16).
    # Double-buffered in+out = ~16 MiB, inside the explicit 32 MiB VMEM limit.
    sublane = max(8, 32 // max(itemsize, 1))       # 8 f32 / 16 bf16 / 32 int8
    tile_rows = _TARGET_TILE_BYTES // (_LANES * itemsize)
    tile_rows = max(sublane, (tile_rows // sublane) * sublane)
    if total_rows <= tile_rows:
        # Small input: split into 2 tiles when cleanly possible so both
        # TensorCores get work on v7x; otherwise one full-extent block
        # (block == full dim is always layout-legal).
        half = ((pl.cdiv(total_rows, 2) + sublane - 1) // sublane) * sublane
        tile_rows = half if half < total_rows else total_rows
    grid = (pl.cdiv(total_rows, tile_rows),)

    flops = total_rows * _LANES
    bytes_accessed = 2 * total_rows * _LANES * itemsize + total_rows * itemsize

    out_rows = pl.pallas_call(
        _dropsample_kernel,
        out_shape=jax.ShapeDtypeStruct((total_rows, _LANES), x.dtype),
        grid=grid,
        in_specs=[
            pl.BlockSpec((tile_rows, _LANES), lambda t: (t, 0)),
            pl.BlockSpec((tile_rows, 1), lambda t: (t, 0)),
        ],
        out_specs=pl.BlockSpec((tile_rows, _LANES), lambda t: (t, 0)),
        # TODO(synk): re-enable input_output_aliases={0: 0} once call sites
        # jit+donate x; without donation XLA copy-protects the aliased view
        # and the alias costs a hidden full HBM pass instead of saving one.
        compiler_params=pltpu.CompilerParams(
            dimension_semantics=("parallel",),
            vmem_limit_bytes=_VMEM_LIMIT_BYTES),
        cost_estimate=pl.CostEstimate(
            flops=flops, transcendentals=0, bytes_accessed=bytes_accessed),
    )(x_rows, s_rows)

    out = out_rows.reshape(B, Lp)
    if Lp != L:
        out = out[:, :L]
    return out.reshape(B, C, H, W)


if __name__ == "__main__":
    key = jax.random.PRNGKey(0)
    kx, km = jax.random.split(key)

    B, C, H, W = 2, 4, 16, 16
    x = jax.random.normal(kx, (B, C, H, W), dtype=jnp.float32)
    prob = 0.25

    # Training path with prob > 0 (scale applied in-kernel).
    out = jax.block_until_ready(dropsample(x, prob, km, training=True))

    # Pure-JAX reference for correctness (same key -> same uniform draws).
    u = jax.random.uniform(km, (B,), dtype=jnp.float32)
    scales = jnp.where(u > prob, 1.0 / (1.0 - jnp.float32(prob)), 0.0)
    ref = x * scales[:, None, None, None]
    assert out.shape == x.shape and out.dtype == x.dtype
    assert jnp.allclose(out, ref, atol=1e-6, rtol=1e-6)

    # Identity paths: prob == 0, or eval mode.
    assert jnp.array_equal(jax.block_until_ready(dropsample(x, 0.0, km, True)), x)
    assert jnp.array_equal(jax.block_until_ready(dropsample(x, prob, km, False)), x)

    # Non-128-aligned feature size (exercises the padding path) in bf16
    # (exercises the dtype-native multiply and the full-extent small block).
    C2, H2, W2 = 3, 7, 5
    x2 = jax.random.normal(kx, (B, C2, H2, W2), dtype=jnp.bfloat16)
    out2 = jax.block_until_ready(dropsample(x2, prob, km, training=True))
    ref2 = x2 * scales.astype(jnp.bfloat16)[:, None, None, None]
    assert out2.shape == x2.shape and out2.dtype == x2.dtype
    assert jnp.allclose(out2.astype(jnp.float32), ref2.astype(jnp.float32),
                        atol=1e-2, rtol=1e-2)

    print("KERNEL_OK")
</pallas_src>

<mosaic_0001>
module attributes {stable_mosaic.version = 11 : i64} {
  func.func @_dropsample_kernel(%arg0: i32, %arg1: memref<8x128xf32, #tpu.memory_space<vmem>>, %arg2: memref<8x1xf32, #tpu.memory_space<vmem>>, %arg3: memref<8x128xf32, #tpu.memory_space<vmem>>) attributes {dimension_semantics = [#tpu.dimension_semantics<parallel>], iteration_bounds = array<i64: 2>, scalar_prefetch = 0 : i64, scratch_operands = 0 : i64, tpu.core_type = #tpu.core_type<tc>, window_params = [{transform_indices = @transform_0, window_bounds = array<i64: 8, 128>}, {transform_indices = @transform_1, window_bounds = array<i64: 8, 1>}, {transform_indices = @transform_2, window_bounds = array<i64: 8, 128>}]} {
    %c0 = arith.constant 0 : index
    %c0_0 = arith.constant 0 : index
    %0 = vector.load %arg1[%c0, %c0_0] : memref<8x128xf32, #tpu.memory_space<vmem>>, vector<8x128xf32>
    %c0_1 = arith.constant 0 : index
    %c0_2 = arith.constant 0 : index
    %1 = vector.load %arg2[%c0_1, %c0_2] : memref<8x1xf32, #tpu.memory_space<vmem>>, vector<8x1xf32>
    %2 = vector.broadcast %1 : vector<8x1xf32> to vector<8x128xf32>
    %3 = arith.mulf %0, %2 : vector<8x128xf32>
    %c0_3 = arith.constant 0 : index
    %c0_4 = arith.constant 0 : index
    %4 = vector.load %arg3[%c0_3, %c0_4] : memref<8x128xf32, #tpu.memory_space<vmem>>, vector<8x128xf32>
    tpu.vector_store %arg3[%c0_3, %c0_4], %3 {strides = array<i32>} : memref<8x128xf32, #tpu.memory_space<vmem>>, vector<8x128xf32>,
    return
  }
  func.func @transform_0(%arg0: i32) -> (i32, i32) {
    %c0_i32 = arith.constant 0 : i32
    %c0_i32_0 = arith.constant 0 : i32
    return %arg0, %c0_i32 : i32, i32
  }
  func.func @transform_1(%arg0: i32) -> (i32, i32) {
    %c0_i32 = arith.constant 0 : i32
    %c0_i32_0 = arith.constant 0 : i32
    return %arg0, %c0_i32 : i32, i32
  }
  func.func @transform_2(%arg0: i32) -> (i32, i32) {
    %c0_i32 = arith.constant 0 : i32
    %c0_i32_0 = arith.constant 0 : i32
    return %arg0, %c0_i32 : i32, i32
  }
}

</mosaic_0001>

<llo_original>
// kernel: tpu_custom_call.1
$region0: #{tpu_custom_call.1}
  #allocation0 [shape = 'u32[]', space=smem, size = 0x4, offset = 0x4, fixed_abs, tag = 'smem constant byte address 0x4 - core index']
  #allocation1 [shape = 'u32[72,128]{1,0:T(1,128)}', space=vmem, size = 0x9000, scoped, tag = 'internal scratch']
  %s0 = inlined_call_operand.vmem [shape: f32[16,128], index: 0, kind: input, shape index: {}]
  %s1 = inlined_call_operand.vmem [shape: f32[16,1], index: 1, kind: input, shape index: {}]
  %s2 = inlined_call_operand.hbm [shape: f32[16,128], index: 2, kind: output, shape index: {}]
  %s3 = sld [smem:[#allocation0]]
  $region41: #{tpu_custom_call.1} parent=0
    _
  %s5 = ssub.s32 1, %s3
  %s6 = scalar_select 0, %s5, %s3
  $region1: #{tpu_custom_call.1} parent=0
    #allocation2 [shape = 'u8[8192]{0}', space=vmem, size = 0x2000, scoped, tag = 'output window, operand 0']
    #allocation3 [shape = 's32[2]{0}', space=sflag, size = 0x8, scoped, tag = 'scoped memory for tpu_custom_call.1']
    %7 = vsyncpa [#allocation3], 0
    %s8 = scalar_lea.sflag [#allocation3], 1
    %9 = vsyncpa %s8, 0
    loop: start=0, step=1, limit=4
    $region2: #{tpu_custom_call.1} parent=1 // loop_pre_header
      _
    $region3: #{tpu_custom_call.1} parent=1 // loop_header
      %s11 = sphi 0, %s15
      %p12 = scmp.ge.s32.totalorder %s11, 4
      %s21 = sphi 0, %s23
      %s24 = sphi 0, %s21
      %s25 = sphi 0, %s24
      %s41 = sphi 0, %s25
      %s47 = sphi 0, %s49
      %s50 = sphi 0, %s47
      %s51 = sphi 0, %s50
      %s67 = sphi 0, %s51
      %s73 = sphi 0, %s75
      %s76 = sphi 0, %s73
      %s77 = sphi 0, %s76
      %s93 = sphi 0, %s77
    $region4: #{tpu_custom_call.1} parent=1 // loop_header_branch
      %14 = sbr.rel (%p12) target = $region8
    $region5: #{tpu_custom_call.1} parent=1 // loop_body
      %s16 = ssub.s32 %s11, 1
      %s17 = ssub.s32 %s11, 2
      %s18 = sadd.s32 %s11, 1
      %s19 = ssub.s32 %s11, %s18
      %p20 = scmp.eq.s32.totalorder %s19, 0
      %s22 = sadd.s32 %s21, 1
      %s23 = scalar_select %p20, %s21, %s22
      %p26 = pneg %p20
      %p27 = scmp.eq.s32.totalorder %s11, 1
      %p28 = por %p26, %p27
      %p29 = scmp.ne.s32.totalorder %s21, %s24
      %p30 = scmp.eq.s32.totalorder %s11, 0
      %p31 = por %p29, %p30
      %p32 = scmp.ne.s32.totalorder %s21, %s24
      %p33 = scmp.eq.s32.totalorder %s16, 1
      %p34 = por %p32, %p33
      %p35 = scmp.ne.s32.totalorder %s24, %s25
      %p36 = scmp.eq.s32.totalorder %s16, 0
      %p37 = por %p35, %p36
      %p38 = scmp.ne.s32.totalorder %s24, %s25
      %p39 = scmp.eq.s32.totalorder %s17, 1
      %p40 = por %p38, %p39
      %p42 = scmp.ne.s32.totalorder %s25, %s41
      %p43 = scmp.eq.s32.totalorder %s17, 0
      %p44 = por %p42, %p43
      %s45 = ssub.s32 %s11, %s18
      %p46 = scmp.eq.s32.totalorder %s45, 0
      %s48 = sadd.s32 %s47, 1
      %s49 = scalar_select %p46, %s47, %s48
      %p52 = pneg %p46
      %p53 = scmp.eq.s32.totalorder %s11, 1
      %p54 = por %p52, %p53
      %p55 = scmp.ne.s32.totalorder %s47, %s50
      %p56 = scmp.eq.s32.totalorder %s11, 0
      %p57 = por %p55, %p56
      %p58 = scmp.ne.s32.totalorder %s47, %s50
      %p59 = scmp.eq.s32.totalorder %s16, 1
      %p60 = por %p58, %p59
      %p61 = scmp.ne.s32.totalorder %s50, %s51
      %p62 = scmp.eq.s32.totalorder %s16, 0
      %p63 = por %p61, %p62
      %p64 = scmp.ne.s32.totalorder %s50, %s51
      %p65 = scmp.eq.s32.totalorder %s17, 1
      %p66 = por %p64, %p65
      %p68 = scmp.ne.s32.totalorder %s51, %s67
      %p69 = scmp.eq.s32.totalorder %s17, 0
      %p70 = por %p68, %p69
      %s71 = ssub.s32 %s11, %s18
      %p72 = scmp.eq.s32.totalorder %s71, 0
      %s74 = sadd.s32 %s73, 1
      %s75 = scalar_select %p72, %s73, %s74
      %p78 = pneg %p72
      %p79 = scmp.eq.s32.totalorder %s11, 1
      %p80 = por %p78, %p79
      %p81 = scmp.ne.s32.totalorder %s73, %s76
      %p82 = scmp.eq.s32.totalorder %s11, 0
      %p83 = por %p81, %p82
      %p84 = scmp.ne.s32.totalorder %s73, %s76
      %p85 = scmp.eq.s32.totalorder %s16, 1
      %p86 = por %p84, %p85
      %p87 = scmp.ne.s32.totalorder %s76, %s77
      %p88 = scmp.eq.s32.totalorder %s16, 0
      %p89 = por %p87, %p88
      %p90 = scmp.ne.s32.totalorder %s76, %s77
      %p91 = scmp.eq.s32.totalorder %s17, 1
      %p92 = por %p90, %p91
      %p94 = scmp.ne.s32.totalorder %s77, %s93
      %p95 = scmp.eq.s32.totalorder %s17, 0
      %p96 = por %p94, %p95
      %p97 = scmp.le.s32.totalorder 1, %s11
      %p98 = scmp.lt.s32.totalorder %s11, 3
      %p99 = pnand %p97, %p98
      %p100 = pneg %p99
      // Predicated region
      $region9: #{tpu_custom_call.1} parent=5 // pred_check
        _
      $region10: #{tpu_custom_call.1} parent=5 // pred_check_branch
        %102 = sbr.rel (%p99) target = $region12
      $region11: #{tpu_custom_call.1} parent=5 // pred_region
        %s103 = ssub.s32 %s11, 1
      $region12: #{tpu_custom_call.1} parent=5 // pred_fallthru
        _
      %p104 = scmp.lt.s32.totalorder %s11, 2
      // Predicated region
      $region13: #{tpu_custom_call.1} parent=5 // pred_check
        %p105 = pneg %p104
      $region14: #{tpu_custom_call.1} parent=5 // pred_check_branch
        %107 = sbr.rel (%p105) target = $region16
      $region15: #{tpu_custom_call.1} parent=5 // pred_region
        // Predicated region
        $region17: #{tpu_custom_call.1} parent=15 // pred_check
          %p108 = pneg %p31
        $region18: #{tpu_custom_call.1} parent=15 // pred_check_branch
          %110 = sbr.rel (%p108) target = $region20
        $region19: #{tpu_custom_call.1} parent=15 // pred_region
          %p111 = scmp.lt.s32.totalorder %s11, 1
          %s112 = scalar_select %p111, %s11, 1
          %s113 = smul.addr %s112, 8
          %s114 = scalar_lea.vmem %s0, %s113
        $region20: #{tpu_custom_call.1} parent=15 // pred_fallthru
          _
        // Predicated region
        $region21: #{tpu_custom_call.1} parent=15 // pred_check
          %p115 = pneg %p57
        $region22: #{tpu_custom_call.1} parent=15 // pred_check_branch
          %117 = sbr.rel (%p115) target = $region24
        $region23: #{tpu_custom_call.1} parent=15 // pred_region
          %p118 = scmp.lt.s32.totalorder %s11, 1
          %s119 = scalar_select %p118, %s11, 1
          %s120 = smul.addr %s119, 8
          %s121 = scalar_lea.vmem %s1, %s120
        $region24: #{tpu_custom_call.1} parent=15 // pred_fallthru
          _
      $region16: #{tpu_custom_call.1} parent=5 // pred_fallthru
        _
      %p122 = scmp.le.s32.totalorder 1, %s11
      %p123 = scmp.lt.s32.totalorder %s11, 3
      %p124 = pnand %p122, %p123
      %p125 = pneg %p124
      // Predicated region
      $region25: #{tpu_custom_call.1} parent=5 // pred_check
        _
      $region26: #{tpu_custom_call.1} parent=5 // pred_check_branch
        %127 = sbr.rel (%p124) target = $region28
      $region27: #{tpu_custom_call.1} parent=5 // pred_region
        %s128 = ssub.s32 %s11, 1
        %p129 = scmp.lt.s32.totalorder %s16, 1
        %s130 = scalar_select %p129, %s16, 1
        %s131 = smul.addr %s130, 8
        %s132 = scalar_lea.vmem %s0, %s131
        %p133 = pneg %p37
        %p134 = pneg %p34
        %p135 = scmp.lt.s32.totalorder %s16, 1
        %s136 = scalar_select %p135, %s16, 1
        %s137 = smul.addr %s136, 8
        %s138 = scalar_lea.vmem %s1, %s137
        %p139 = pneg %p63
        %p140 = pneg %p60
        %p141 = pneg %p89
        %p142 = pneg %p86
        %s143 = sand.u32 %s76, 1
        %s144 = scalar_lea.sflag [#allocation3], %s143
        %s145 = sand.u32 %s76, 1
        %s146 = smul.addr %s145, 8
        %s147 = scalar_lea.vmem [#allocation2], %s146
        %p148 = scmp.lt.s32.totalorder %s16, 1
        %s149 = scalar_select %p148, %s16, 1
        %s150 = smul.addr %s149, 8
        %s151 = scalar_lea.vmem %s0, %s150
        %p152 = scmp.lt.s32.totalorder %s16, 1
        %s153 = scalar_select %p152, %s16, 1
        %s154 = smul.addr %s153, 8
        %s155 = scalar_lea.vmem %s1, %s154
        %v156 = vld [vmem:[%s151] sm:$0xff]
        %v157 = vld [vmem:[%s155] sm:$0xff]
        %159 = vset.pattern.permute.xlu0 0
        %160 = vperm.xlu0 %159, %v157
        %v161 = vpop.permute.xlu0 %160
        %v163 = vmul.f32 %v156, %v161
        %164 = vst [vmem:[%s147] sm:$0xff] %v163
        %s165 = sand.u32 %s76, 1
        %s166 = scalar_lea.sflag [#allocation3], %s165
        %s167 = sand.u32 %s76, 1
        %s168 = smul.addr %s167, 8
        %s169 = scalar_lea.vmem [#allocation2], %s168
        // Predicated region
        $region29: #{tpu_custom_call.1} parent=27 // pred_check
          %p170 = pneg %p86
        $region30: #{tpu_custom_call.1} parent=27 // pred_check_branch
          %172 = sbr.rel (%p170) target = $region32
        $region31: #{tpu_custom_call.1} parent=27 // pred_region
          %174 = vsyncadd %s166, 0
          %s175 = smul.addr %s16, 8
          %s176 = scalar_lea.hbm %s2, %s175
          %s178 = sshll.u32 %s169, 4
          %s179 = int_to_ptr.vmem [resolvable:$true] %s178
          %s180 = sshll.u32 %s176, 4
          %s181 = int_to_ptr.hbm [resolvable:$true] %s180
          %183 = dma.vmem_to_hbm [thread:$0]  %s179, 128, %s181, %s166
        $region32: #{tpu_custom_call.1} parent=27 // pred_fallthru
          _
      $region28: #{tpu_custom_call.1} parent=5 // pred_fallthru
        _
      %p184 = scmp.le.s32.totalorder 2, %s11
      // Predicated region
      $region33: #{tpu_custom_call.1} parent=5 // pred_check
        %p185 = pneg %p184
      $region34: #{tpu_custom_call.1} parent=5 // pred_check_branch
        %187 = sbr.rel (%p185) target = $region36
      $region35: #{tpu_custom_call.1} parent=5 // pred_region
        %s188 = ssub.s32 %s11, 2
        // Predicated region
        $region37: #{tpu_custom_call.1} parent=35 // pred_check
          %p189 = pneg %p92
        $region38: #{tpu_custom_call.1} parent=35 // pred_check_branch
          %191 = sbr.rel (%p189) target = $region40
        $region39: #{tpu_custom_call.1} parent=35 // pred_region
          %s192 = sand.u32 %s77, 1
          %s193 = scalar_lea.sflag [#allocation3], %s192
          %s194 = sand.u32 %s77, 1
          %s195 = smul.addr %s194, 8
          %s196 = scalar_lea.vmem [#allocation2], %s195
          %198 = dma.done %s193, 128
        $region40: #{tpu_custom_call.1} parent=35 // pred_fallthru
          _
      $region36: #{tpu_custom_call.1} parent=5 // pred_fallthru
        _
    $region6: #{tpu_custom_call.1} parent=1 // loop_footer
      %s15 = sadd.s32 1, %s11
    $region7: #{tpu_custom_call.1} parent=1 // loop_footer_branch
      %10 = sbr.rel target = $region3
    $region8: #{tpu_custom_call.1} parent=1 // loop_exit
      _
    %199 = vsyncpa [#allocation3], 1
    %s200 = scalar_lea.sflag [#allocation3], 1
    %201 = vsyncpa %s200, 1

</llo_original>
